<compile_context>
chip_gen: v7x
topology: tpu7x:2x2x1
jax: 0.10.0
libtpu: 0.0.40
codegen_flags: <defaults>
</compile_context>

<pallas_src>
import functools

import jax
import jax.numpy as jnp
from jax.experimental import pallas as pl
from jax.experimental.pallas import tpu as pltpu


# ---------------------------------------------------------------------------
# Kernel
# ---------------------------------------------------------------------------
def autonet_kernel(x_ref, w1_ref, b1_ref, w2_ref, b2_ref, w3_ref, b3_ref, o_ref):
    wdt = w1_ref.dtype  # matmul-operand dtype (f32 or bf16); accumulate in f32

    x = x_ref[...]
    # layer 1: dense (fused low-rank) linear + relu
    h1 = jnp.dot(x, w1_ref[...], preferred_element_type=jnp.float32) + b1_ref[...]
    h1 = jnp.maximum(h1, 0.0)
    # layer 2: dense (fused low-rank) linear + relu
    h2 = jnp.dot(h1.astype(wdt), w2_ref[...],
                 preferred_element_type=jnp.float32) + b2_ref[...]
    h2 = jnp.maximum(h2, 0.0)
    # layer 3: dense linear (no activation)
    out = jnp.dot(h2.astype(wdt), w3_ref[...],
                  preferred_element_type=jnp.float32) + b3_ref[...]
    o_ref[...] = out.astype(o_ref.dtype)


# ---------------------------------------------------------------------------
# Wrapper
# ---------------------------------------------------------------------------
def _round_up(n, m):
    return ((n + m - 1) // m) * m


def _pad_axis(a, axis, target):
    pad = target - a.shape[axis]
    if pad == 0:
        return a
    widths = [(0, 0)] * a.ndim
    widths[axis] = (0, pad)
    return jnp.pad(a, widths)


@functools.partial(jax.jit, static_argnames=("batch_tile", "compute_dtype"))
def autonet_forward(x, params, *, batch_tile=None, compute_dtype=jnp.float32):
    """x: (B, input_size) float32.  params: dict of weights (see init_params)."""
    B, in_size = x.shape
    f32 = jnp.float32
    LANE = 128

    # --- fuse the low-rank factors into dense per-layer weights (one-time) ---
    w1 = params["u1"].astype(f32) @ params["v1"].astype(f32)       # (in,  h1)
    w2 = params["u2"].astype(f32) @ params["v2"].astype(f32)       # (h1,  h2)
    w3 = params["w3"].astype(f32)                                  # (h2, out)
    b1 = params["b1"].astype(f32)
    b2 = params["b2"].astype(f32)
    b3 = params["b3"].astype(f32)

    h1 = w1.shape[1]
    h2 = w2.shape[1]
    out_size = w3.shape[1]

    # --- pad hidden / output feature dims to full lane width (zeros) ---------
    h1_p = _round_up(h1, LANE)
    h2_p = _round_up(h2, LANE)
    out_p = _round_up(out_size, LANE)
    w1 = _pad_axis(w1, 1, h1_p)
    b1 = _pad_axis(b1, 1, h1_p)
    w2 = _pad_axis(_pad_axis(w2, 0, h1_p), 1, h2_p)
    b2 = _pad_axis(b2, 1, h2_p)
    w3 = _pad_axis(_pad_axis(w3, 0, h2_p), 1, out_p)
    b3 = _pad_axis(b3, 1, out_p)

    # matmul operands in compute_dtype (bf16 on v6e/v7x if desired); biases f32
    w1 = w1.astype(compute_dtype)
    w2 = w2.astype(compute_dtype)
    w3 = w3.astype(compute_dtype)
    x_in = x.astype(compute_dtype)

    # --- batch tiling: large tiles, pad ragged batch with zero rows ----------
    if batch_tile is None:
        batch_tile = min(_round_up(B, 8), 512)
    batch_tile = max(8, _round_up(int(batch_tile), 8))
    B_pad = _round_up(B, batch_tile)
    if B_pad != B:
        x_in = _pad_axis(x_in, 0, B_pad)
    grid = (B_pad // batch_tile,)

    out_dtype = x.dtype

    # --- specs ----------------------------------------------------------------
    def whole(arr):
        nd = arr.ndim
        return pl.BlockSpec(arr.shape, lambda i, _nd=nd: (0,) * _nd)

    in_specs = [
        pl.BlockSpec((batch_tile, in_size), lambda i: (i, 0)),
        whole(w1), whole(b1),
        whole(w2), whole(b2),
        whole(w3), whole(b3),
    ]
    out_spec = pl.BlockSpec((batch_tile, out_p), lambda i: (i, 0))

    # --- scheduling hints -------------------------------------------------------
    item = jnp.dtype(compute_dtype).itemsize
    w_bytes = sum(int(a.size) * a.dtype.itemsize for a in (w1, b1, w2, b2, w3, b3))
    x_tile_bytes = batch_tile * in_size * item
    out_tile_bytes = batch_tile * out_p * jnp.dtype(out_dtype).itemsize
    vmem_est = 2 * (x_tile_bytes + out_tile_bytes) + 2 * w_bytes + (2 << 20)
    vmem_limit = int(min(vmem_est, 48 << 20)) if vmem_est > (16 << 20) else None

    flops = 2 * B_pad * (in_size * h1_p + h1_p * h2_p + h2_p * out_p)
    bytes_accessed = (int(x_in.size) * item + w_bytes
                      + B_pad * out_p * jnp.dtype(out_dtype).itemsize)
    cost = pl.CostEstimate(flops=flops, transcendentals=0,
                           bytes_accessed=bytes_accessed)

    out = pl.pallas_call(
        autonet_kernel,
        out_shape=jax.ShapeDtypeStruct((B_pad, out_p), out_dtype),
        grid_spec=pltpu.PrefetchScalarGridSpec(
            num_scalar_prefetch=0,
            grid=grid,
            in_specs=in_specs,
            out_specs=out_spec,
        ),
        compiler_params=pltpu.CompilerParams(
            dimension_semantics=("parallel",),
            vmem_limit_bytes=vmem_limit,
        ),
        cost_estimate=cost,
    )(x_in, w1, b1, w2, b2, w3, b3)

    # strip batch + lane padding
    return out[:B, :out_size]


# ---------------------------------------------------------------------------
# Parameter init (matches the module's parameter shapes) and pure-JAX reference
# ---------------------------------------------------------------------------
def init_params(key, input_size, hidden_sizes, output_size, rank, dtype=jnp.float32):
    ks = jax.random.split(key, 8)
    h1, h2 = hidden_sizes
    scale = 0.1
    return {
        # AdaptiveRankLinear 1: U (in, rank), V (rank, h1), bias (1, h1)
        "u1": scale * jax.random.normal(ks[0], (input_size, rank), dtype),
        "v1": scale * jax.random.normal(ks[1], (rank, h1), dtype),
        "b1": scale * jax.random.normal(ks[2], (1, h1), dtype),
        # AdaptiveRankLinear 2: U (h1, rank), V (rank, h2), bias (1, h2)
        "u2": scale * jax.random.normal(ks[3], (h1, rank), dtype),
        "v2": scale * jax.random.normal(ks[4], (rank, h2), dtype),
        "b2": scale * jax.random.normal(ks[5], (1, h2), dtype),
        # nn.Linear: weight stored PyTorch-style (out, in) then transposed to (in, out)
        "w3": scale * jax.random.normal(ks[6], (output_size, h2), dtype).T,
        "b3": scale * jax.random.normal(ks[7], (1, output_size), dtype),
    }


def autonet_ref(x, p):
    h1 = jnp.maximum(x @ p["u1"] @ p["v1"] + p["b1"], 0.0)
    h2 = jnp.maximum(h1 @ p["u2"] @ p["v2"] + p["b2"], 0.0)
    return h2 @ p["w3"] + p["b3"]


if __name__ == "__main__":
    # TODO(synk): AdaptiveRankLinear's rank-adaptation machinery is training-time
    # only; forward is implemented as the low-rank factorized linear it computes.
    input_size = 32
    hidden_sizes = (64, 64)
    output_size = 16
    rank = 8
    batch = 16

    key = jax.random.PRNGKey(0)
    k_x, k_p = jax.random.split(key)
    x = jax.random.normal(k_x, (batch, input_size), jnp.float32)
    params = init_params(k_p, input_size, hidden_sizes, output_size, rank)

    # f32 compute keeps the tight tolerance; pass compute_dtype=jnp.bfloat16 on
    # v6e/v7x for the fast MXU path (looser tolerance).
    out = autonet_forward(x, params)
    out = jax.block_until_ready(out)

    ref = autonet_ref(x, params)
    assert out.shape == (batch, output_size)
    assert jnp.allclose(out, ref, atol=2e-5, rtol=2e-5), "mismatch vs reference"
    print("KERNEL_OK")
</pallas_src>

<mosaic_0001>
module attributes {stable_mosaic.version = 11 : i64} {
  func.func @autonet_kernel(%arg0: i32, %arg1: memref<16x32xf32, #tpu.memory_space<vmem>>, %arg2: memref<32x128xf32, #tpu.memory_space<vmem>>, %arg3: memref<1x128xf32, #tpu.memory_space<vmem>>, %arg4: memref<128x128xf32, #tpu.memory_space<vmem>>, %arg5: memref<1x128xf32, #tpu.memory_space<vmem>>, %arg6: memref<128x128xf32, #tpu.memory_space<vmem>>, %arg7: memref<1x128xf32, #tpu.memory_space<vmem>>, %arg8: memref<16x128xf32, #tpu.memory_space<vmem>>) attributes {dimension_semantics = [#tpu.dimension_semantics<parallel>], iteration_bounds = array<i64: 1>, scalar_prefetch = 0 : i64, scratch_operands = 0 : i64, tpu.core_type = #tpu.core_type<tc>, window_params = [{transform_indices = @transform_0, window_bounds = array<i64: 16, 32>}, {pipeline_mode = #tpu.pipeline_mode<synchronous>, transform_indices = @transform_1, window_bounds = array<i64: 32, 128>}, {pipeline_mode = #tpu.pipeline_mode<synchronous>, transform_indices = @transform_2, window_bounds = array<i64: 1, 128>}, {pipeline_mode = #tpu.pipeline_mode<synchronous>, transform_indices = @transform_3, window_bounds = array<i64: 128, 128>}, {pipeline_mode = #tpu.pipeline_mode<synchronous>, transform_indices = @transform_4, window_bounds = array<i64: 1, 128>}, {pipeline_mode = #tpu.pipeline_mode<synchronous>, transform_indices = @transform_5, window_bounds = array<i64: 128, 128>}, {pipeline_mode = #tpu.pipeline_mode<synchronous>, transform_indices = @transform_6, window_bounds = array<i64: 1, 128>}, {transform_indices = @transform_7, window_bounds = array<i64: 16, 128>}]} {
    %c0 = arith.constant 0 : index
    %c0_0 = arith.constant 0 : index
    %0 = vector.load %arg1[%c0, %c0_0] : memref<16x32xf32, #tpu.memory_space<vmem>>, vector<16x32xf32>
    %c0_1 = arith.constant 0 : index
    %c0_2 = arith.constant 0 : index
    %1 = vector.load %arg2[%c0_1, %c0_2] : memref<32x128xf32, #tpu.memory_space<vmem>>, vector<32x128xf32>
    %cst = arith.constant dense<0.000000e+00> : vector<16x128xf32>
    %2 = tpu.matmul %0, %1, %cst {dimension_numbers = #tpu.dot_dimension_numbers<[1], [0], [0], [1], [0, 0, 1, 1], [], []>} : vector<16x32xf32>, vector<32x128xf32>, vector<16x128xf32> -> vector<16x128xf32>
    %c0_3 = arith.constant 0 : index
    %c0_4 = arith.constant 0 : index
    %3 = vector.load %arg3[%c0_3, %c0_4] : memref<1x128xf32, #tpu.memory_space<vmem>>, vector<1x128xf32>
    %4 = vector.broadcast %3 : vector<1x128xf32> to vector<16x128xf32>
    %5 = arith.addf %2, %4 : vector<16x128xf32>
    %cst_5 = arith.constant 0.000000e+00 : f32
    %6 = vector.broadcast %cst_5 : f32 to vector<16x128xf32>
    %7 = arith.maximumf %5, %6 : vector<16x128xf32>
    %c0_6 = arith.constant 0 : index
    %c0_7 = arith.constant 0 : index
    %8 = vector.load %arg4[%c0_6, %c0_7] : memref<128x128xf32, #tpu.memory_space<vmem>>, vector<128x128xf32>
    %cst_8 = arith.constant dense<0.000000e+00> : vector<16x128xf32>
    %9 = tpu.matmul %7, %8, %cst_8 {dimension_numbers = #tpu.dot_dimension_numbers<[1], [0], [0], [1], [0, 0, 1, 1], [], []>} : vector<16x128xf32>, vector<128x128xf32>, vector<16x128xf32> -> vector<16x128xf32>
    %c0_9 = arith.constant 0 : index
    %c0_10 = arith.constant 0 : index
    %10 = vector.load %arg5[%c0_9, %c0_10] : memref<1x128xf32, #tpu.memory_space<vmem>>, vector<1x128xf32>
    %11 = vector.broadcast %10 : vector<1x128xf32> to vector<16x128xf32>
    %12 = arith.addf %9, %11 : vector<16x128xf32>
    %cst_11 = arith.constant 0.000000e+00 : f32
    %13 = vector.broadcast %cst_11 : f32 to vector<16x128xf32>
    %14 = arith.maximumf %12, %13 : vector<16x128xf32>
    %c0_12 = arith.constant 0 : index
    %c0_13 = arith.constant 0 : index
    %15 = vector.load %arg6[%c0_12, %c0_13] : memref<128x128xf32, #tpu.memory_space<vmem>>, vector<128x128xf32>
    %cst_14 = arith.constant dense<0.000000e+00> : vector<16x128xf32>
    %16 = tpu.matmul %14, %15, %cst_14 {dimension_numbers = #tpu.dot_dimension_numbers<[1], [0], [0], [1], [0, 0, 1, 1], [], []>} : vector<16x128xf32>, vector<128x128xf32>, vector<16x128xf32> -> vector<16x128xf32>
    %c0_15 = arith.constant 0 : index
    %c0_16 = arith.constant 0 : index
    %17 = vector.load %arg7[%c0_15, %c0_16] : memref<1x128xf32, #tpu.memory_space<vmem>>, vector<1x128xf32>
    %18 = vector.broadcast %17 : vector<1x128xf32> to vector<16x128xf32>
    %19 = arith.addf %16, %18 : vector<16x128xf32>
    %c0_17 = arith.constant 0 : index
    %c0_18 = arith.constant 0 : index
    %20 = vector.load %arg8[%c0_17, %c0_18] : memref<16x128xf32, #tpu.memory_space<vmem>>, vector<16x128xf32>
    tpu.vector_store %arg8[%c0_17, %c0_18], %19 {strides = array<i32>} : memref<16x128xf32, #tpu.memory_space<vmem>>, vector<16x128xf32>,
    return
  }
  func.func @transform_0(%arg0: i32) -> (i32, i32) {
    %c0_i32 = arith.constant 0 : i32
    %c0_i32_0 = arith.constant 0 : i32
    return %arg0, %c0_i32 : i32, i32
  }
  func.func @transform_1(%arg0: i32) -> (i32, i32) {
    %c0_i32 = arith.constant 0 : i32
    %c0_i32_0 = arith.constant 0 : i32
    %c0_i32_1 = arith.constant 0 : i32
    return %c0_i32, %c0_i32_0 : i32, i32
  }
  func.func @transform_2(%arg0: i32) -> (i32, i32) {
    %c0_i32 = arith.constant 0 : i32
    %c0_i32_0 = arith.constant 0 : i32
    %c0_i32_1 = arith.constant 0 : i32
    return %c0_i32, %c0_i32_0 : i32, i32
  }
  func.func @transform_3(%arg0: i32) -> (i32, i32) {
    %c0_i32 = arith.constant 0 : i32
    %c0_i32_0 = arith.constant 0 : i32
    %c0_i32_1 = arith.constant 0 : i32
    return %c0_i32, %c0_i32_0 : i32, i32
  }
  func.func @transform_4(%arg0: i32) -> (i32, i32) {
    %c0_i32 = arith.constant 0 : i32
    %c0_i32_0 = arith.constant 0 : i32
    %c0_i32_1 = arith.constant 0 : i32
    return %c0_i32, %c0_i32_0 : i32, i32
  }
  func.func @transform_5(%arg0: i32) -> (i32, i32) {
    %c0_i32 = arith.constant 0 : i32
    %c0_i32_0 = arith.constant 0 : i32
    %c0_i32_1 = arith.constant 0 : i32
    return %c0_i32, %c0_i32_0 : i32, i32
  }
  func.func @transform_6(%arg0: i32) -> (i32, i32) {
    %c0_i32 = arith.constant 0 : i32
    %c0_i32_0 = arith.constant 0 : i32
    %c0_i32_1 = arith.constant 0 : i32
    return %c0_i32, %c0_i32_0 : i32, i32
  }
  func.func @transform_7(%arg0: i32) -> (i32, i32) {
    %c0_i32 = arith.constant 0 : i32
    %c0_i32_0 = arith.constant 0 : i32
    return %arg0, %c0_i32 : i32, i32
  }
}

</mosaic_0001>

<llo_original>
// kernel: autonet_forward.1
$region0: #{autonet_forward.1}
  #allocation0 [shape = 'u32[]', space=smem, size = 0x4, offset = 0x4, fixed_abs, tag = 'smem constant byte address 0x4 - core index']
  #allocation1 [shape = 'u32[144,128]{1,0:T(1,128)}', space=vmem, size = 0x12000, scoped, tag = 'internal scratch']
  %s0 = inlined_call_operand.vmem [shape: f32[16,32], index: 0, kind: input, shape index: {}]
  %s1 = inlined_call_operand.vmem [shape: f32[32,128], index: 1, kind: input, shape index: {}]
  %s2 = inlined_call_operand.vmem [shape: f32[1,128], index: 2, kind: input, shape index: {}]
  %s3 = inlined_call_operand.vmem [shape: f32[128,128], index: 3, kind: input, shape index: {}]
  %s4 = inlined_call_operand.vmem [shape: f32[1,128], index: 4, kind: input, shape index: {}]
  %s5 = inlined_call_operand.vmem [shape: f32[128,128], index: 5, kind: input, shape index: {}]
  %s6 = inlined_call_operand.vmem [shape: f32[1,128], index: 6, kind: input, shape index: {}]
  %s7 = inlined_call_operand.hbm [shape: f32[16,128], index: 7, kind: output, shape index: {}]
  %s8 = sld [smem:[#allocation0]]
  $region38: #{autonet_forward.1} parent=0
    _
  %s10 = ssub.s32 1, %s8
  %s11 = scalar_select 0, %s10, %s8
  $region1: #{autonet_forward.1} parent=0
    #allocation2 [shape = 'u8[8192]{0}', space=vmem, size = 0x2000, scoped, tag = 'output window, operand 0, single buffered']
    #allocation3 [shape = 's32[1]{0}', space=sflag, size = 0x4, scoped, tag = 'scoped memory for autonet_forward.1']
    %12 = vsyncpa [#allocation3], 0
    // Predicated region
    $region2: #{autonet_forward.1} parent=1 // pred_check
      _
    $region3: #{autonet_forward.1} parent=1 // pred_check_branch
      %14 = sbr.rel (0) target = $region5
    $region4: #{autonet_forward.1} parent=1 // pred_region
      _
    $region5: #{autonet_forward.1} parent=1 // pred_fallthru
      _
    // Predicated region
    $region6: #{autonet_forward.1} parent=1 // pred_check
      _
    $region7: #{autonet_forward.1} parent=1 // pred_check_branch
      %16 = sbr.rel (0) target = $region9
    $region8: #{autonet_forward.1} parent=1 // pred_region
      _
    $region9: #{autonet_forward.1} parent=1 // pred_fallthru
      _
    // Predicated region
    $region10: #{autonet_forward.1} parent=1 // pred_check
      _
    $region11: #{autonet_forward.1} parent=1 // pred_check_branch
      %18 = sbr.rel (0) target = $region13
    $region12: #{autonet_forward.1} parent=1 // pred_region
      _
    $region13: #{autonet_forward.1} parent=1 // pred_fallthru
      _
    // Predicated region
    $region14: #{autonet_forward.1} parent=1 // pred_check
      _
    $region15: #{autonet_forward.1} parent=1 // pred_check_branch
      %20 = sbr.rel (0) target = $region17
    $region16: #{autonet_forward.1} parent=1 // pred_region
      _
    $region17: #{autonet_forward.1} parent=1 // pred_fallthru
      _
    // Predicated region
    $region18: #{autonet_forward.1} parent=1 // pred_check
      _
    $region19: #{autonet_forward.1} parent=1 // pred_check_branch
      %22 = sbr.rel (0) target = $region21
    $region20: #{autonet_forward.1} parent=1 // pred_region
      _
    $region21: #{autonet_forward.1} parent=1 // pred_fallthru
      _
    // Predicated region
    $region22: #{autonet_forward.1} parent=1 // pred_check
      _
    $region23: #{autonet_forward.1} parent=1 // pred_check_branch
      %24 = sbr.rel (0) target = $region25
    $region24: #{autonet_forward.1} parent=1 // pred_region
      _
    $region25: #{autonet_forward.1} parent=1 // pred_fallthru
      _
    // Predicated region
    $region26: #{autonet_forward.1} parent=1 // pred_check
      _
    $region27: #{autonet_forward.1} parent=1 // pred_check_branch
      %26 = sbr.rel (0) target = $region29
    $region28: #{autonet_forward.1} parent=1 // pred_region
      _
    $region29: #{autonet_forward.1} parent=1 // pred_fallthru
      _
    %v27 = vld [vmem:[%s0] sm:$0xff]
    %v28 = vld [vmem:[%s0 + $0x8] sm:$0xff]
    %v29 = vld [vmem:[%s1] sm:$0xff]
    %v30 = vld [vmem:[%s1 + $0x8] sm:$0xff]
    %v31 = vld [vmem:[%s1 + $0x10] sm:$0xff]
    %v32 = vld [vmem:[%s1 + $0x18] sm:$0xff]
    %v33 = vld [vmem:[%s2] sm:$0x1]
    %v35 = vlaneseq
    %v36 = vshrl.u32 %v35, 7
    %v37 = vsub.s32 0, %v36
    %v38 = vrot.slane %v33, %v37
    %vm40 = vcmask 261120
    %v42 = vsel %vm40, %v27, 0
    %v45 = vsel %vm40, %v28, 0
    %47 = vmatprep.subr.mxu0 0.0
    %48 = vmatpush1.msra.mxu0 %v29
    %49 = vmatprep.subr.mxu0 0.0
    %50 = vmatpush1.msra.mxu0 %v30
    %51 = vmatprep.subr.mxu0 0.0
    %52 = vmatpush1.msra.mxu0 %v31
    %53 = vmatprep.subr.mxu0 0.0
    %54 = vmatpush1.msra.mxu0 %v32
    %55 = vmatprep.subr.mxu0 0.0
    %56 = vmatpush1.msra.mxu0 0.0
    %57 = vmatprep.subr.mxu0 0.0
    %58 = vmatpush1.msra.mxu0 0.0
    %59 = vmatprep.subr.mxu0 0.0
    %60 = vmatpush1.msra.mxu0 0.0
    %61 = vmatprep.subr.mxu0 0.0
    %62 = vmatpush1.msra.mxu0 0.0
    %63 = vmatprep.subr.mxu0 0.0
    %64 = vmatpush1.msra.mxu0 0.0
    %65 = vmatprep.subr.mxu0 0.0
    %66 = vmatpush1.msra.mxu0 0.0
    %67 = vmatprep.subr.mxu0 0.0
    %68 = vmatpush1.msra.mxu0 0.0
    %69 = vmatprep.subr.mxu0 0.0
    %70 = vmatpush1.msra.mxu0 0.0
    %71 = vmatprep.subr.mxu0 0.0
    %72 = vmatpush1.msra.mxu0 0.0
    %73 = vmatprep.subr.mxu0 0.0
    %74 = vmatpush1.msra.mxu0 0.0
    %75 = vmatprep.subr.mxu0 0.0
    %76 = vmatpush1.msra.mxu0 0.0
    %77 = vmatprep.subr.mxu0 0.0
    %78 = vmatpush1.msra.mxu0 0.0
    %79 = vmatprep.subr.mxu0 0.0
    %80 = vmatpush1.msra.mxu0 0.0
    %81 = vmatprep.subr.mxu0 0.0
    %82 = vmatpush1.msra.mxu0 0.0
    %83 = vmatprep.subr.mxu0 0.0
    %84 = vmatpush1.msra.mxu0 0.0
    %85 = vmatprep.subr.mxu0 0.0
    %86 = vmatpush1.msra.mxu0 0.0
    %87 = vmatprep.subr.mxu0 0.0
    %88 = vmatpush1.msra.mxu0 0.0
    %89 = vmatprep.subr.mxu0 0.0
    %90 = vmatpush1.msra.mxu0 0.0
    %91 = vmatprep.subr.mxu0 0.0
    %92 = vmatpush1.msra.mxu0 0.0
    %93 = vmatprep.subr.mxu0 0.0
    %94 = vmatpush1.msra.mxu0 0.0
    %95 = vmatprep.subr.mxu0 0.0
    %96 = vmatpush1.msra.mxu0 0.0
    %97 = vmatprep.subr.mxu0 0.0
    %98 = vmatpush1.msra.mxu0 0.0
    %99 = vmatprep.subr.mxu0 0.0
    %100 = vmatpush1.msra.mxu0 0.0
    %101 = vmatprep.subr.mxu0 0.0
    %102 = vmatpush1.msra.mxu0 0.0
    %103 = vmatprep.subr.mxu0 0.0
    %104 = vmatpush1.msra.mxu0 0.0
    %105 = vmatprep.subr.mxu0 0.0
    %106 = vmatpush1.msra.mxu0 0.0
    %107 = vmatprep.subr.mxu0 0.0
    %108 = vmatpush1.msra.mxu0 0.0
    %109 = vmatprep.subr.mxu0 0.0
    %110 = vmatpush1.msra.mxu0 0.0
    %111 = vmatprep.mubr.f32.mxu0 0.0
    %112 = vmatmul.mubr.f32.gmra.mrb[0].mxu0 %v42
    %v113 = vpop.f32.mrb[0].mxu0
    %v114 = vadd.f32 %v38, %v113
    %v115 = vpop.f32.mrb[0].mxu0
    %116 = vmatprep.mubr.f32.mxu0 0.0
    %117 = vmatmul.mubr.f32.gmra.mrb[0].mxu0 %v45
    %v118 = vpop.f32.mrb[0].mxu0
    %v119 = vadd.f32 %v38, %v118
    %v120 = vpop.f32.mrb[0].mxu0
    %121 = vdwg.mxu0
    %v122 = vmax.f32 %v114, 0.0
    %v123 = vmax.f32 %v119, 0.0
    %v124 = vld [vmem:[%s3] sm:$0xff]
    %v125 = vld [vmem:[%s3 + $0x8] sm:$0xff]
    %v126 = vld [vmem:[%s3 + $0x10] sm:$0xff]
    %v127 = vld [vmem:[%s3 + $0x18] sm:$0xff]
    %v128 = vld [vmem:[%s3 + $0x20] sm:$0xff]
    %v129 = vld [vmem:[%s3 + $0x28] sm:$0xff]
    %v130 = vld [vmem:[%s3 + $0x30] sm:$0xff]
    %v131 = vld [vmem:[%s3 + $0x38] sm:$0xff]
    %v132 = vld [vmem:[%s3 + $0x40] sm:$0xff]
    %v133 = vld [vmem:[%s3 + $0x48] sm:$0xff]
    %v134 = vld [vmem:[%s3 + $0x50] sm:$0xff]
    %v135 = vld [vmem:[%s3 + $0x58] sm:$0xff]
    %v136 = vld [vmem:[%s3 + $0x60] sm:$0xff]
    %v137 = vld [vmem:[%s3 + $0x68] sm:$0xff]
    %v138 = vld [vmem:[%s3 + $0x70] sm:$0xff]
    %v139 = vld [vmem:[%s3 + $0x78] sm:$0xff]
    %v140 = vld [vmem:[%s4] sm:$0x1]
    %v142 = vlaneseq
    %v143 = vshrl.u32 %v142, 7
    %v144 = vsub.s32 0, %v143
    %v145 = vrot.slane %v140, %v144
    %147 = vmatprep.subr.mxu0 0.0
    %148 = vmatpush1.msra.mxu0 %v124
    %149 = vmatprep.subr.mxu0 0.0
    %150 = vmatpush1.msra.mxu0 %v125
    %151 = vmatprep.subr.mxu0 0.0
    %152 = vmatpush1.msra.mxu0 %v126
    %153 = vmatprep.subr.mxu0 0.0
    %154 = vmatpush1.msra.mxu0 %v127
    %155 = vmatprep.subr.mxu0 0.0
    %156 = vmatpush1.msra.mxu0 %v128
    %157 = vmatprep.subr.mxu0 0.0
    %158 = vmatpush1.msra.mxu0 %v129
    %159 = vmatprep.subr.mxu0 0.0
    %160 = vmatpush1.msra.mxu0 %v130
    %161 = vmatprep.subr.mxu0 0.0
    %162 = vmatpush1.msra.mxu0 %v131
    %163 = vmatprep.subr.mxu0 0.0
    %164 = vmatpush1.msra.mxu0 %v132
    %165 = vmatprep.subr.mxu0 0.0
    %166 = vmatpush1.msra.mxu0 %v133
    %167 = vmatprep.subr.mxu0 0.0
    %168 = vmatpush1.msra.mxu0 %v134
    %169 = vmatprep.subr.mxu0 0.0
    %170 = vmatpush1.msra.mxu0 %v135
    %171 = vmatprep.subr.mxu0 0.0
    %172 = vmatpush1.msra.mxu0 %v136
    %173 = vmatprep.subr.mxu0 0.0
    %174 = vmatpush1.msra.mxu0 %v137
    %175 = vmatprep.subr.mxu0 0.0
    %176 = vmatpush1.msra.mxu0 %v138
    %177 = vmatprep.subr.mxu0 0.0
    %178 = vmatpush1.msra.mxu0 %v139
    %179 = vmatprep.subr.mxu0 0.0
    %180 = vmatpush1.msra.mxu0 0.0
    %181 = vmatprep.subr.mxu0 0.0
    %182 = vmatpush1.msra.mxu0 0.0
    %183 = vmatprep.subr.mxu0 0.0
    %184 = vmatpush1.msra.mxu0 0.0
    %185 = vmatprep.subr.mxu0 0.0
    %186 = vmatpush1.msra.mxu0 0.0
    %187 = vmatprep.subr.mxu0 0.0
    %188 = vmatpush1.msra.mxu0 0.0
    %189 = vmatprep.subr.mxu0 0.0
    %190 = vmatpush1.msra.mxu0 0.0
    %191 = vmatprep.subr.mxu0 0.0
    %192 = vmatpush1.msra.mxu0 0.0
    %193 = vmatprep.subr.mxu0 0.0
    %194 = vmatpush1.msra.mxu0 0.0
    %195 = vmatprep.subr.mxu0 0.0
    %196 = vmatpush1.msra.mxu0 0.0
    %197 = vmatprep.subr.mxu0 0.0
    %198 = vmatpush1.msra.mxu0 0.0
    %199 = vmatprep.subr.mxu0 0.0
    %200 = vmatpush1.msra.mxu0 0.0
    %201 = vmatprep.subr.mxu0 0.0
    %202 = vmatpush1.msra.mxu0 0.0
    %203 = vmatprep.subr.mxu0 0.0
    %204 = vmatpush1.msra.mxu0 0.0
    %205 = vmatprep.subr.mxu0 0.0
    %206 = vmatpush1.msra.mxu0 0.0
    %207 = vmatprep.subr.mxu0 0.0
    %208 = vmatpush1.msra.mxu0 0.0
    %209 = vmatprep.subr.mxu0 0.0
    %210 = vmatpush1.msra.mxu0 0.0
    %211 = vmatprep.mubr.f32.mxu0 0.0
    %212 = vmatmul.mubr.f32.gmra.mrb[0].mxu0 %v122
    %v213 = vpop.f32.mrb[0].mxu0
    %v214 = vadd.f32 %v145, %v213
    %v215 = vpop.f32.mrb[0].mxu0
    %216 = vmatprep.mubr.f32.mxu0 0.0
    %217 = vmatmul.mubr.f32.gmra.mrb[0].mxu0 %v123
    %v218 = vpop.f32.mrb[0].mxu0
    %v219 = vadd.f32 %v145, %v218
    %v220 = vpop.f32.mrb[0].mxu0
    %221 = vdwg.mxu0
    %v222 = vmax.f32 %v214, 0.0
    %v223 = vmax.f32 %v219, 0.0
    %v224 = vld [vmem:[%s5] sm:$0xff]
    %v225 = vld [vmem:[%s5 + $0x8] sm:$0xff]
    %v226 = vld [vmem:[%s5 + $0x10] sm:$0xff]
    %v227 = vld [vmem:[%s5 + $0x18] sm:$0xff]
    %v228 = vld [vmem:[%s5 + $0x20] sm:$0xff]
    %v229 = vld [vmem:[%s5 + $0x28] sm:$0xff]
    %v230 = vld [vmem:[%s5 + $0x30] sm:$0xff]
    %v231 = vld [vmem:[%s5 + $0x38] sm:$0xff]
    %v232 = vld [vmem:[%s5 + $0x40] sm:$0xff]
    %v233 = vld [vmem:[%s5 + $0x48] sm:$0xff]
    %v234 = vld [vmem:[%s5 + $0x50] sm:$0xff]
    %v235 = vld [vmem:[%s5 + $0x58] sm:$0xff]
    %v236 = vld [vmem:[%s5 + $0x60] sm:$0xff]
    %v237 = vld [vmem:[%s5 + $0x68] sm:$0xff]
    %v238 = vld [vmem:[%s5 + $0x70] sm:$0xff]
    %v239 = vld [vmem:[%s5 + $0x78] sm:$0xff]
    %v240 = vld [vmem:[%s6] sm:$0x1]
    %v242 = vlaneseq
    %v243 = vshrl.u32 %v242, 7
    %v244 = vsub.s32 0, %v243
    %v245 = vrot.slane %v240, %v244
    %247 = vmatprep.subr.mxu0 0.0
    %248 = vmatpush1.msra.mxu0 %v224
    %249 = vmatprep.subr.mxu0 0.0
    %250 = vmatpush1.msra.mxu0 %v225
    %251 = vmatprep.subr.mxu0 0.0
    %252 = vmatpush1.msra.mxu0 %v226
    %253 = vmatprep.subr.mxu0 0.0
    %254 = vmatpush1.msra.mxu0 %v227
    %255 = vmatprep.subr.mxu0 0.0
    %256 = vmatpush1.msra.mxu0 %v228
    %257 = vmatprep.subr.mxu0 0.0
    %258 = vmatpush1.msra.mxu0 %v229
    %259 = vmatprep.subr.mxu0 0.0
    %260 = vmatpush1.msra.mxu0 %v230
    %261 = vmatprep.subr.mxu0 0.0
    %262 = vmatpush1.msra.mxu0 %v231
    %263 = vmatprep.subr.mxu0 0.0
    %264 = vmatpush1.msra.mxu0 %v232
    %265 = vmatprep.subr.mxu0 0.0
    %266 = vmatpush1.msra.mxu0 %v233
    %267 = vmatprep.subr.mxu0 0.0
    %268 = vmatpush1.msra.mxu0 %v234
    %269 = vmatprep.subr.mxu0 0.0
    %270 = vmatpush1.msra.mxu0 %v235
    %271 = vmatprep.subr.mxu0 0.0
    %272 = vmatpush1.msra.mxu0 %v236
    %273 = vmatprep.subr.mxu0 0.0
    %274 = vmatpush1.msra.mxu0 %v237
    %275 = vmatprep.subr.mxu0 0.0
    %276 = vmatpush1.msra.mxu0 %v238
    %277 = vmatprep.subr.mxu0 0.0
    %278 = vmatpush1.msra.mxu0 %v239
    %279 = vmatprep.subr.mxu0 0.0
    %280 = vmatpush1.msra.mxu0 0.0
    %281 = vmatprep.subr.mxu0 0.0
    %282 = vmatpush1.msra.mxu0 0.0
    %283 = vmatprep.subr.mxu0 0.0
    %284 = vmatpush1.msra.mxu0 0.0
    %285 = vmatprep.subr.mxu0 0.0
    %286 = vmatpush1.msra.mxu0 0.0
    %287 = vmatprep.subr.mxu0 0.0
    %288 = vmatpush1.msra.mxu0 0.0
    %289 = vmatprep.subr.mxu0 0.0
    %290 = vmatpush1.msra.mxu0 0.0
    %291 = vmatprep.subr.mxu0 0.0
    %292 = vmatpush1.msra.mxu0 0.0
    %293 = vmatprep.subr.mxu0 0.0
    %294 = vmatpush1.msra.mxu0 0.0
    %295 = vmatprep.subr.mxu0 0.0
    %296 = vmatpush1.msra.mxu0 0.0
    %297 = vmatprep.subr.mxu0 0.0
    %298 = vmatpush1.msra.mxu0 0.0
    %299 = vmatprep.subr.mxu0 0.0
    %300 = vmatpush1.msra.mxu0 0.0
    %301 = vmatprep.subr.mxu0 0.0
    %302 = vmatpush1.msra.mxu0 0.0
    %303 = vmatprep.subr.mxu0 0.0
    %304 = vmatpush1.msra.mxu0 0.0
    %305 = vmatprep.subr.mxu0 0.0
    %306 = vmatpush1.msra.mxu0 0.0
    %307 = vmatprep.subr.mxu0 0.0
    %308 = vmatpush1.msra.mxu0 0.0
    %309 = vmatprep.subr.mxu0 0.0
    %310 = vmatpush1.msra.mxu0 0.0
    %311 = vmatprep.mubr.f32.mxu0 0.0
    %312 = vmatmul.mubr.f32.gmra.mrb[0].mxu0 %v222
    %v313 = vpop.f32.mrb[0].mxu0
    %v314 = vadd.f32 %v245, %v313
    %v315 = vpop.f32.mrb[0].mxu0
    %316 = vmatprep.mubr.f32.mxu0 0.0
    %317 = vmatmul.mubr.f32.gmra.mrb[0].mxu0 %v223
    %v318 = vpop.f32.mrb[0].mxu0
    %v319 = vadd.f32 %v245, %v318
    %v320 = vpop.f32.mrb[0].mxu0
    %321 = vdwg.mxu0
    %322 = vst [vmem:[#allocation2] sm:$0xff] %v314
    %323 = vst [vmem:[#allocation2 + $0x8] sm:$0xff] %v319
    // Predicated region
    $region30: #{autonet_forward.1} parent=1 // pred_check
      _
    $region31: #{autonet_forward.1} parent=1 // pred_check_branch
      %325 = sbr.rel (0) target = $region33
    $region32: #{autonet_forward.1} parent=1 // pred_region
      %s327 = ssub.s32 256, 256
      %328 = vsyncadd [#allocation3], %s327
      %s329 = sshll.u32 [#allocation2], 4
      %s330 = int_to_ptr.vmem [resolvable:$true] %s329
      %335 = dma.vmem_to_hbm [thread:$0]  %s330, 256, %s7, [#allocation3], 128, 128, 8
    $region33: #{autonet_forward.1} parent=1 // pred_fallthru
      _
    // Predicated region
    $region34: #{autonet_forward.1} parent=1 // pred_check
      _
    $region35: #{autonet_forward.1} parent=1 // pred_check_branch
      %337 = sbr.rel (0) target = $region37
    $region36: #{autonet_forward.1} parent=1 // pred_region
      %338 = dma.done [#allocation3], 256
    $region37: #{autonet_forward.1} parent=1 // pred_fallthru
      _
    %339 = vsyncpa [#allocation3], 1

</llo_original>
